<compile_context>
chip_gen: v7x
topology: tpu7x:2x2x1
jax: 0.10.0
libtpu: 0.0.40
codegen_flags: <defaults>
</compile_context>

<pallas_src>
import jax
import jax.numpy as jnp
from jax.experimental import pallas as pl
from jax.experimental.pallas import tpu as pltpu


def _linear_kernel(w_ref, b_ref, x_ref, o_ref):
    # w_ref: (OUT, IN)   f32 in SMEM (PyTorch weight layout, read as scalars)
    # b_ref: (OUT,)      f32 in SMEM
    # x_ref: (IN, 8, L)  in VMEM -- batch on (sublane, lane): fully dense vregs
    # o_ref: (OUT, 8, L) in VMEM
    OUT, IN = w_ref.shape
    x = x_ref[...].astype(jnp.float32)                 # (IN, 8, L)
    rows = []
    for j in range(OUT):                               # 3 output features
        acc = x[0] * w_ref[j, 0]
        for k in range(1, IN):                         # 9 dense VPU broadcast FMAs
            acc = acc + x[k] * w_ref[j, k]
        rows.append(acc + b_ref[j])
    # One unmasked full-block store (3 dense (8, L) slabs).
    o_ref[...] = jnp.stack(rows, axis=0).astype(o_ref.dtype)


def linear_forward_featmajor(xT, weight, bias, *, tb=131072):
    """y^T = W @ x^T + b for feature-major activations (no boundary relayouts).

    xT: (IN, B) with B % 8 == 0.  Returns yT: (OUT, B).
    tb = batch lanes per grid step (sweep parameter, multiple of 1024);
    double-buffered in+out VMEM per step is ~48 * tb bytes.
    """
    IN, B = xT.shape
    OUT, IN_w = weight.shape
    assert IN == IN_w and bias.shape == (OUT,)
    assert B % 8 == 0, "feature-major Pallas path requires B % 8 == 0"
    assert tb % 1024 == 0 and tb > 0, "tb must be a positive multiple of 1024"

    G = B // 8                                         # lane extent of the full array
    # Lanes per tile: multiple of 128, never (much) wider than the data.
    L = min(tb // 8, pl.cdiv(G, 128) * 128)
    n_tiles = pl.cdiv(G, L)                            # ragged last block is masked

    x3 = xT.reshape(IN, 8, G)                          # free row-major split of batch

    grid_spec = pltpu.PrefetchScalarGridSpec(
        num_scalar_prefetch=0,
        grid=(n_tiles,),
        in_specs=[
            # 9 + 3 scalars stay SMEM-resident across all grid steps.
            pl.BlockSpec(memory_space=pltpu.MemorySpace.SMEM),   # weight (OUT, IN)
            pl.BlockSpec(memory_space=pltpu.MemorySpace.SMEM),   # bias   (OUT,)
            # Dense (8, L) slab per feature; no host-side pad needed.
            pl.BlockSpec((IN, 8, L), lambda i: (0, 0, i)),
        ],
        out_specs=pl.BlockSpec((OUT, 8, L), lambda i: (0, 0, i)),
    )

    y3 = pl.pallas_call(
        _linear_kernel,
        out_shape=jax.ShapeDtypeStruct((OUT, 8, G), xT.dtype),
        grid_spec=grid_spec,
        compiler_params=pltpu.CompilerParams(
            dimension_semantics=("parallel",),         # batch tiles shard across TCs (v7x)
        ),
    )(weight.astype(jnp.float32), bias.astype(jnp.float32), x3)

    return y3.reshape(OUT, B)                          # free metadata reshape


def linear_forward(x, weight, bias, *, tb=131072, min_pallas_batch=None):
    """Matches torch.nn.Linear(3, 3): y = x @ weight.T + bias, x: (B, IN).

    The Pallas kernel wants feature-major data, so this wrapper pays one
    transpose of x and one of y (each a full HBM read+write pass).  That only
    pays off for very large batches; otherwise the fused XLA linear (single
    HBM pass) is already at roofline, so we fall back to it.
    """
    B = x.shape[0]
    if min_pallas_batch is None:
        min_pallas_batch = 4 * tb                      # also guarantees >= 4 tiles (v7x: feed both TCs)
    if B < min_pallas_batch or B % 8 != 0:
        return x @ weight.T + bias                     # fused XLA: one HBM pass
    yT = linear_forward_featmajor(x.T, weight, bias, tb=tb)
    return yT.T


if __name__ == "__main__":
    key = jax.random.PRNGKey(0)
    kx1, kx2, kx3, kw, kb = jax.random.split(key, 5)

    IN, OUT = 3, 3
    bound = 1.0 / jnp.sqrt(jnp.float32(IN))
    weight = jax.random.uniform(kw, (OUT, IN), minval=-bound, maxval=bound,
                                dtype=jnp.float32)
    bias = jax.random.uniform(kb, (OUT,), minval=-bound, maxval=bound,
                              dtype=jnp.float32)

    # 1) Feature-major Pallas path (zero boundary relayouts) with a ragged last
    #    tile: B1 % 8 == 0 but not a multiple of the tile -> exercises Pallas's
    #    masked partial block (no host-side pad/slice).
    B1 = 4104
    x1 = jax.random.normal(kx1, (B1, IN), dtype=jnp.float32)
    xT1 = x1.T                                         # the surrounding model would keep this layout
    yT1 = linear_forward_featmajor(xT1, weight, bias, tb=2048)
    jax.block_until_ready(yT1)
    ref1 = x1 @ weight.T + bias
    assert yT1.shape == (OUT, B1)
    assert jnp.allclose(yT1.T, ref1, atol=1e-5, rtol=1e-5), "feature-major pallas mismatch"

    # 2) PyTorch-layout wrapper forced onto the Pallas path at a small demo
    #    batch (explicit small tb / min_pallas_batch so the kernel runs here).
    B2 = 2048
    x2 = jax.random.normal(kx2, (B2, IN), dtype=jnp.float32)
    y2 = linear_forward(x2, weight, bias, tb=1024, min_pallas_batch=1024)
    jax.block_until_ready(y2)
    assert jnp.allclose(y2, x2 @ weight.T + bias, atol=1e-5, rtol=1e-5), \
        "wrapper pallas mismatch"

    # 3) Tiny / non-multiple-of-8 batch -> fused-XLA fallback.
    B3 = 6
    x3 = jax.random.normal(kx3, (B3, IN), dtype=jnp.float32)
    y3 = linear_forward(x3, weight, bias)
    jax.block_until_ready(y3)
    assert jnp.allclose(y3, x3 @ weight.T + bias, atol=1e-5, rtol=1e-5), \
        "fallback mismatch"

    print("KERNEL_OK")
</pallas_src>

<mosaic_0001>
module attributes {stable_mosaic.version = 11 : i64} {
  func.func @_linear_kernel(%arg0: i32, %arg1: memref<3x3xf32, #tpu.memory_space<smem>>, %arg2: memref<3xf32, #tpu.memory_space<smem>>, %arg3: memref<3x8x256xf32, #tpu.memory_space<vmem>>, %arg4: memref<3x8x256xf32, #tpu.memory_space<vmem>>) attributes {dimension_semantics = [#tpu.dimension_semantics<parallel>], iteration_bounds = array<i64: 3>, scalar_prefetch = 0 : i64, scratch_operands = 0 : i64, tpu.core_type = #tpu.core_type<tc>, window_params = [{transform_indices = @transform_0, window_bounds = array<i64: 3, 3>}, {transform_indices = @transform_1, window_bounds = array<i64: 3>}, {transform_indices = @transform_2, window_bounds = array<i64: 3, 8, 256>}, {transform_indices = @transform_3, window_bounds = array<i64: 3, 8, 256>}]} {
    %c0 = arith.constant 0 : index
    %c0_0 = arith.constant 0 : index
    %c0_1 = arith.constant 0 : index
    %0 = vector.load %arg3[%c0, %c0_0, %c0_1] : memref<3x8x256xf32, #tpu.memory_space<vmem>>, vector<3x8x256xf32>
    %1 = vector.extract_strided_slice %0 {offsets = [0, 0, 0], sizes = [1, 8, 256], strides = [1, 1, 1]} : vector<3x8x256xf32> to vector<1x8x256xf32>
    %2 = vector.shape_cast %1 : vector<1x8x256xf32> to vector<8x256xf32>
    %c0_2 = arith.constant 0 : index
    %c0_3 = arith.constant 0 : index
    %3 = memref.load %arg1[%c0_2, %c0_3] : memref<3x3xf32, #tpu.memory_space<smem>>
    %4 = vector.broadcast %3 : f32 to vector<8x256xf32>
    %5 = arith.mulf %2, %4 : vector<8x256xf32>
    %6 = vector.extract_strided_slice %0 {offsets = [1, 0, 0], sizes = [1, 8, 256], strides = [1, 1, 1]} : vector<3x8x256xf32> to vector<1x8x256xf32>
    %7 = vector.shape_cast %6 : vector<1x8x256xf32> to vector<8x256xf32>
    %c0_4 = arith.constant 0 : index
    %c1 = arith.constant 1 : index
    %8 = memref.load %arg1[%c0_4, %c1] : memref<3x3xf32, #tpu.memory_space<smem>>
    %9 = vector.broadcast %8 : f32 to vector<8x256xf32>
    %10 = arith.mulf %7, %9 : vector<8x256xf32>
    %11 = arith.addf %5, %10 : vector<8x256xf32>
    %12 = vector.extract_strided_slice %0 {offsets = [2, 0, 0], sizes = [1, 8, 256], strides = [1, 1, 1]} : vector<3x8x256xf32> to vector<1x8x256xf32>
    %13 = vector.shape_cast %12 : vector<1x8x256xf32> to vector<8x256xf32>
    %c0_5 = arith.constant 0 : index
    %c2 = arith.constant 2 : index
    %14 = memref.load %arg1[%c0_5, %c2] : memref<3x3xf32, #tpu.memory_space<smem>>
    %15 = vector.broadcast %14 : f32 to vector<8x256xf32>
    %16 = arith.mulf %13, %15 : vector<8x256xf32>
    %17 = arith.addf %11, %16 : vector<8x256xf32>
    %c0_6 = arith.constant 0 : index
    %18 = memref.load %arg2[%c0_6] : memref<3xf32, #tpu.memory_space<smem>>
    %19 = vector.broadcast %18 : f32 to vector<8x256xf32>
    %20 = arith.addf %17, %19 : vector<8x256xf32>
    %21 = vector.extract_strided_slice %0 {offsets = [0, 0, 0], sizes = [1, 8, 256], strides = [1, 1, 1]} : vector<3x8x256xf32> to vector<1x8x256xf32>
    %22 = vector.shape_cast %21 : vector<1x8x256xf32> to vector<8x256xf32>
    %c1_7 = arith.constant 1 : index
    %c0_8 = arith.constant 0 : index
    %23 = memref.load %arg1[%c1_7, %c0_8] : memref<3x3xf32, #tpu.memory_space<smem>>
    %24 = vector.broadcast %23 : f32 to vector<8x256xf32>
    %25 = arith.mulf %22, %24 : vector<8x256xf32>
    %26 = vector.extract_strided_slice %0 {offsets = [1, 0, 0], sizes = [1, 8, 256], strides = [1, 1, 1]} : vector<3x8x256xf32> to vector<1x8x256xf32>
    %27 = vector.shape_cast %26 : vector<1x8x256xf32> to vector<8x256xf32>
    %c1_9 = arith.constant 1 : index
    %c1_10 = arith.constant 1 : index
    %28 = memref.load %arg1[%c1_9, %c1_10] : memref<3x3xf32, #tpu.memory_space<smem>>
    %29 = vector.broadcast %28 : f32 to vector<8x256xf32>
    %30 = arith.mulf %27, %29 : vector<8x256xf32>
    %31 = arith.addf %25, %30 : vector<8x256xf32>
    %32 = vector.extract_strided_slice %0 {offsets = [2, 0, 0], sizes = [1, 8, 256], strides = [1, 1, 1]} : vector<3x8x256xf32> to vector<1x8x256xf32>
    %33 = vector.shape_cast %32 : vector<1x8x256xf32> to vector<8x256xf32>
    %c1_11 = arith.constant 1 : index
    %c2_12 = arith.constant 2 : index
    %34 = memref.load %arg1[%c1_11, %c2_12] : memref<3x3xf32, #tpu.memory_space<smem>>
    %35 = vector.broadcast %34 : f32 to vector<8x256xf32>
    %36 = arith.mulf %33, %35 : vector<8x256xf32>
    %37 = arith.addf %31, %36 : vector<8x256xf32>
    %c1_13 = arith.constant 1 : index
    %38 = memref.load %arg2[%c1_13] : memref<3xf32, #tpu.memory_space<smem>>
    %39 = vector.broadcast %38 : f32 to vector<8x256xf32>
    %40 = arith.addf %37, %39 : vector<8x256xf32>
    %41 = vector.extract_strided_slice %0 {offsets = [0, 0, 0], sizes = [1, 8, 256], strides = [1, 1, 1]} : vector<3x8x256xf32> to vector<1x8x256xf32>
    %42 = vector.shape_cast %41 : vector<1x8x256xf32> to vector<8x256xf32>
    %c2_14 = arith.constant 2 : index
    %c0_15 = arith.constant 0 : index
    %43 = memref.load %arg1[%c2_14, %c0_15] : memref<3x3xf32, #tpu.memory_space<smem>>
    %44 = vector.broadcast %43 : f32 to vector<8x256xf32>
    %45 = arith.mulf %42, %44 : vector<8x256xf32>
    %46 = vector.extract_strided_slice %0 {offsets = [1, 0, 0], sizes = [1, 8, 256], strides = [1, 1, 1]} : vector<3x8x256xf32> to vector<1x8x256xf32>
    %47 = vector.shape_cast %46 : vector<1x8x256xf32> to vector<8x256xf32>
    %c2_16 = arith.constant 2 : index
    %c1_17 = arith.constant 1 : index
    %48 = memref.load %arg1[%c2_16, %c1_17] : memref<3x3xf32, #tpu.memory_space<smem>>
    %49 = vector.broadcast %48 : f32 to vector<8x256xf32>
    %50 = arith.mulf %47, %49 : vector<8x256xf32>
    %51 = arith.addf %45, %50 : vector<8x256xf32>
    %52 = vector.extract_strided_slice %0 {offsets = [2, 0, 0], sizes = [1, 8, 256], strides = [1, 1, 1]} : vector<3x8x256xf32> to vector<1x8x256xf32>
    %53 = vector.shape_cast %52 : vector<1x8x256xf32> to vector<8x256xf32>
    %c2_18 = arith.constant 2 : index
    %c2_19 = arith.constant 2 : index
    %54 = memref.load %arg1[%c2_18, %c2_19] : memref<3x3xf32, #tpu.memory_space<smem>>
    %55 = vector.broadcast %54 : f32 to vector<8x256xf32>
    %56 = arith.mulf %53, %55 : vector<8x256xf32>
    %57 = arith.addf %51, %56 : vector<8x256xf32>
    %c2_20 = arith.constant 2 : index
    %58 = memref.load %arg2[%c2_20] : memref<3xf32, #tpu.memory_space<smem>>
    %59 = vector.broadcast %58 : f32 to vector<8x256xf32>
    %60 = arith.addf %57, %59 : vector<8x256xf32>
    %61 = vector.shape_cast %20 : vector<8x256xf32> to vector<1x8x256xf32>
    %62 = vector.shape_cast %40 : vector<8x256xf32> to vector<1x8x256xf32>
    %63 = vector.shape_cast %60 : vector<8x256xf32> to vector<1x8x256xf32>
    %64 = tpu.concatenate %61, %62, %63 in 0 : vector<1x8x256xf32>, vector<1x8x256xf32>, vector<1x8x256xf32> -> vector<3x8x256xf32>
    %c0_21 = arith.constant 0 : index
    %c0_22 = arith.constant 0 : index
    %c0_23 = arith.constant 0 : index
    %65 = vector.load %arg4[%c0_21, %c0_22, %c0_23] : memref<3x8x256xf32, #tpu.memory_space<vmem>>, vector<3x8x256xf32>
    tpu.vector_store %arg4[%c0_21, %c0_22, %c0_23], %64 {strides = array<i32>} : memref<3x8x256xf32, #tpu.memory_space<vmem>>, vector<3x8x256xf32>,
    return
  }
  func.func @transform_0(%arg0: i32) -> (i32, i32) {
    %c0_i32 = arith.constant 0 : i32
    %c0_i32_0 = arith.constant 0 : i32
    %c0_i32_1 = arith.constant 0 : i32
    return %c0_i32, %c0_i32_0 : i32, i32
  }
  func.func @transform_1(%arg0: i32) -> i32 {
    %c0_i32 = arith.constant 0 : i32
    %c0_i32_0 = arith.constant 0 : i32
    return %c0_i32 : i32
  }
  func.func @transform_2(%arg0: i32) -> (i32, i32, i32) {
    %c0_i32 = arith.constant 0 : i32
    %c0_i32_0 = arith.constant 0 : i32
    %c0_i32_1 = arith.constant 0 : i32
    return %c0_i32, %c0_i32_0, %arg0 : i32, i32, i32
  }
  func.func @transform_3(%arg0: i32) -> (i32, i32, i32) {
    %c0_i32 = arith.constant 0 : i32
    %c0_i32_0 = arith.constant 0 : i32
    %c0_i32_1 = arith.constant 0 : i32
    return %c0_i32, %c0_i32_0, %arg0 : i32, i32, i32
  }
}

</mosaic_0001>

<llo_original>
// kernel: tpu_custom_call.1
$region0: #{tpu_custom_call.1}
  #allocation0 [shape = 'u32[]', space=smem, size = 0x4, offset = 0x4, fixed_abs, tag = 'smem constant byte address 0x4 - core index']
  #allocation1 [shape = 'u32[144,128]{1,0:T(1,128)}', space=vmem, size = 0x12000, scoped, tag = 'internal scratch']
  %s0 = inlined_call_operand.hbm [shape: f32[3,3], index: 0, kind: input, shape index: {}]
  %s1 = inlined_call_operand.vmem [shape: f32[3], index: 1, kind: input, shape index: {}]
  %s2 = inlined_call_operand.hbm [shape: f32[3,8,513], index: 2, kind: input, shape index: {}]
  %s3 = inlined_call_operand.hbm [shape: f32[3,8,513], index: 3, kind: output, shape index: {}]
  %s4 = sld [smem:[#allocation0]]
  $region57: #{tpu_custom_call.1} parent=0
    _
  %s6 = ssub.s32 1, %s4
  %s7 = scalar_select 0, %s6, %s4
  $region1: #{tpu_custom_call.1} parent=0
    #allocation2 [shape = 'u8[2048]{0}', space=smem, size = 0x800, scoped, tag = 'input window, operand 0, single buffered']
    #allocation3 [shape = 's32[2]{0}', space=sflag, size = 0x8, scoped, tag = 'scoped memory for tpu_custom_call.1']
    #allocation4 [shape = 's32[2]{0}', space=sflag, size = 0x8, scoped, tag = 'scoped memory for tpu_custom_call.1']
    #allocation5 [shape = 's32[2]{0}', space=sflag, size = 0x8, scoped, tag = 'scoped memory for tpu_custom_call.1']
    #allocation6 [shape = 's32[2]{0}', space=sflag, size = 0x8, scoped, tag = 'scoped memory for tpu_custom_call.1']
    #allocation7 [shape = 'u8[512]{0}', space=smem, size = 0x200, scoped, tag = 'input window, operand 1, single buffered']
    #allocation8 [shape = 'u8[49152]{0}', space=vmem, size = 0xc000, scoped, tag = 'input window, operand 2']
    #allocation9 [shape = 'u8[49152]{0}', space=vmem, size = 0xc000, scoped, tag = 'output window, operand 0']
    %8 = vsyncpa [#allocation5], 0
    %9 = vsyncpa [#allocation6], 0
    %10 = vsyncpa [#allocation3], 0
    %s11 = scalar_lea.sflag [#allocation3], 1
    %12 = vsyncpa %s11, 0
    %13 = vsyncpa [#allocation4], 0
    %s14 = scalar_lea.sflag [#allocation4], 1
    %15 = vsyncpa %s14, 0
    loop: start=0, step=1, limit=5
    $region2: #{tpu_custom_call.1} parent=1 // loop_pre_header
      _
    $region3: #{tpu_custom_call.1} parent=1 // loop_header
      %s17 = sphi 0, %s21
      %p18 = scmp.ge.s32.totalorder %s17, 5
      %s25 = sphi 0, %s25
      %s27 = sphi 0, %s25
      %s28 = sphi 0, %s27
      %s42 = sphi 0, %s28
      %s46 = sphi 0, %s46
      %s48 = sphi 0, %s46
      %s49 = sphi 0, %s48
      %s63 = sphi 0, %s49
      %s69 = sphi 0, %s71
      %s72 = sphi 0, %s69
      %s73 = sphi 0, %s72
      %s89 = sphi 0, %s73
      %s95 = sphi 0, %s97
      %s98 = sphi 0, %s95
      %s99 = sphi 0, %s98
      %s115 = sphi 0, %s99
    $region4: #{tpu_custom_call.1} parent=1 // loop_header_branch
      %20 = sbr.rel (%p18) target = $region8
    $region5: #{tpu_custom_call.1} parent=1 // loop_body
      %s22 = ssub.s32 %s17, 1
      %s23 = ssub.s32 %s17, 2
      %s24 = sadd.s32 %s17, 1
      %s26 = sadd.s32 %s25, 1
      %p29 = scmp.eq.s32.totalorder %s17, 2
      %p30 = scmp.ne.s32.totalorder %s25, %s27
      %p31 = scmp.eq.s32.totalorder %s17, 0
      %p32 = por %p30, %p31
      %p33 = scmp.ne.s32.totalorder %s25, %s27
      %p34 = scmp.eq.s32.totalorder %s22, 2
      %p35 = por %p33, %p34
      %p36 = scmp.ne.s32.totalorder %s27, %s28
      %p37 = scmp.eq.s32.totalorder %s22, 0
      %p38 = por %p36, %p37
      %p39 = scmp.ne.s32.totalorder %s27, %s28
      %p40 = scmp.eq.s32.totalorder %s23, 2
      %p41 = por %p39, %p40
      %p43 = scmp.ne.s32.totalorder %s28, %s42
      %p44 = scmp.eq.s32.totalorder %s23, 0
      %p45 = por %p43, %p44
      %s47 = sadd.s32 %s46, 1
      %p50 = scmp.eq.s32.totalorder %s17, 2
      %p51 = scmp.ne.s32.totalorder %s46, %s48
      %p52 = scmp.eq.s32.totalorder %s17, 0
      %p53 = por %p51, %p52
      %p54 = scmp.ne.s32.totalorder %s46, %s48
      %p55 = scmp.eq.s32.totalorder %s22, 2
      %p56 = por %p54, %p55
      %p57 = scmp.ne.s32.totalorder %s48, %s49
      %p58 = scmp.eq.s32.totalorder %s22, 0
      %p59 = por %p57, %p58
      %p60 = scmp.ne.s32.totalorder %s48, %s49
      %p61 = scmp.eq.s32.totalorder %s23, 2
      %p62 = por %p60, %p61
      %p64 = scmp.ne.s32.totalorder %s49, %s63
      %p65 = scmp.eq.s32.totalorder %s23, 0
      %p66 = por %p64, %p65
      %s67 = ssub.s32 %s17, %s24
      %p68 = scmp.eq.s32.totalorder %s67, 0
      %s70 = sadd.s32 %s69, 1
      %s71 = scalar_select %p68, %s69, %s70
      %p74 = pneg %p68
      %p75 = scmp.eq.s32.totalorder %s17, 2
      %p76 = por %p74, %p75
      %p77 = scmp.ne.s32.totalorder %s69, %s72
      %p78 = scmp.eq.s32.totalorder %s17, 0
      %p79 = por %p77, %p78
      %p80 = scmp.ne.s32.totalorder %s69, %s72
      %p81 = scmp.eq.s32.totalorder %s22, 2
      %p82 = por %p80, %p81
      %p83 = scmp.ne.s32.totalorder %s72, %s73
      %p84 = scmp.eq.s32.totalorder %s22, 0
      %p85 = por %p83, %p84
      %p86 = scmp.ne.s32.totalorder %s72, %s73
      %p87 = scmp.eq.s32.totalorder %s23, 2
      %p88 = por %p86, %p87
      %p90 = scmp.ne.s32.totalorder %s73, %s89
      %p91 = scmp.eq.s32.totalorder %s23, 0
      %p92 = por %p90, %p91
      %s93 = ssub.s32 %s17, %s24
      %p94 = scmp.eq.s32.totalorder %s93, 0
      %s96 = sadd.s32 %s95, 1
      %s97 = scalar_select %p94, %s95, %s96
      %p100 = pneg %p94
      %p101 = scmp.eq.s32.totalorder %s17, 2
      %p102 = por %p100, %p101
      %p103 = scmp.ne.s32.totalorder %s95, %s98
      %p104 = scmp.eq.s32.totalorder %s17, 0
      %p105 = por %p103, %p104
      %p106 = scmp.ne.s32.totalorder %s95, %s98
      %p107 = scmp.eq.s32.totalorder %s22, 2
      %p108 = por %p106, %p107
      %p109 = scmp.ne.s32.totalorder %s98, %s99
      %p110 = scmp.eq.s32.totalorder %s22, 0
      %p111 = por %p109, %p110
      %p112 = scmp.ne.s32.totalorder %s98, %s99
      %p113 = scmp.eq.s32.totalorder %s23, 2
      %p114 = por %p112, %p113
      %p116 = scmp.ne.s32.totalorder %s99, %s115
      %p117 = scmp.eq.s32.totalorder %s23, 0
      %p118 = por %p116, %p117
      %p119 = scmp.le.s32.totalorder 1, %s17
      %p120 = scmp.lt.s32.totalorder %s17, 4
      %p121 = pnand %p119, %p120
      %p122 = pneg %p121
      // Predicated region
      $region9: #{tpu_custom_call.1} parent=5 // pred_check
        _
      $region10: #{tpu_custom_call.1} parent=5 // pred_check_branch
        %124 = sbr.rel (%p121) target = $region12
      $region11: #{tpu_custom_call.1} parent=5 // pred_region
        %s125 = ssub.s32 %s17, 1
        // Predicated region
        $region13: #{tpu_custom_call.1} parent=11 // pred_check
          %p126 = pneg %p38
        $region14: #{tpu_custom_call.1} parent=11 // pred_check_branch
          %128 = sbr.rel (%p126) target = $region16
        $region15: #{tpu_custom_call.1} parent=11 // pred_region
          %s130 = ssub.s32 64, 64
          %131 = vsyncadd [#allocation5], %s130
          %134 = dma.hbm_to_smem %s0, 64, [#allocation2], [#allocation5]
        $region16: #{tpu_custom_call.1} parent=11 // pred_fallthru
          _
        // Predicated region
        $region17: #{tpu_custom_call.1} parent=11 // pred_check
          %p135 = pneg %p59
        $region18: #{tpu_custom_call.1} parent=11 // pred_check_branch
          %137 = sbr.rel (%p135) target = $region20
        $region19: #{tpu_custom_call.1} parent=11 // pred_region
          %s139 = ssub.s32 16, 16
          %140 = vsyncadd [#allocation6], %s139
          %s142 = sshll.u32 %s1, 4
          %s143 = int_to_ptr.vmem [resolvable:$true] %s142
          %145 = dma.vmem_to_smem %s143, 16, [#allocation7], [#allocation6]
        $region20: #{tpu_custom_call.1} parent=11 // pred_fallthru
          _
      $region12: #{tpu_custom_call.1} parent=5 // pred_fallthru
        _
      %p146 = scmp.lt.s32.totalorder %s17, 3
      // Predicated region
      $region21: #{tpu_custom_call.1} parent=5 // pred_check
        %p147 = pneg %p146
      $region22: #{tpu_custom_call.1} parent=5 // pred_check_branch
        %149 = sbr.rel (%p147) target = $region24
      $region23: #{tpu_custom_call.1} parent=5 // pred_region
        // Predicated region
        $region25: #{tpu_custom_call.1} parent=23 // pred_check
          %p150 = pneg %p79
        $region26: #{tpu_custom_call.1} parent=23 // pred_check_branch
          %152 = sbr.rel (%p150) target = $region28
        $region27: #{tpu_custom_call.1} parent=23 // pred_region
          %s153 = sand.u32 %s69, 1
          %s154 = scalar_lea.sflag [#allocation3], %s153
          %s155 = sand.u32 %s69, 1
          %s156 = smul.addr %s155, 48
          %s157 = scalar_lea.vmem [#allocation8], %s156
          %s158 = smul.u32 2, %s17
          %s159 = ssub.s32 5, %s158
          %p160 = scmp.lt.s32.totalorder %s159, 2
          %s161 = scalar_select %p160, %s159, 2
          %s162 = smul.u32 384, %s161
          %s164 = ssub.s32 768, %s162
          %165 = vsyncadd %s154, %s164
          %p166 = scmp.ne.s32.totalorder 0, %s162
          %s167 = smul.addr %s158, 128
          %s168 = scalar_lea.hbm %s2, %s167
          %s169 = smul.u32 %s161, 8
          %s170 = smul.u32 %s169, 3
          %s171 = sshll.u32 %s157, 4
          %s172 = int_to_ptr.vmem [resolvable:$true] %s171
          %s173 = sshll.u32 %s170, 4
          %177 = dma.hbm_to_vmem [thread:$0]  (%p166), %s168, %s173, %s172, %s154, 640, 256, %s169
        $region28: #{tpu_custom_call.1} parent=23 // pred_fallthru
          _
      $region24: #{tpu_custom_call.1} parent=5 // pred_fallthru
        _
      %p178 = scmp.le.s32.totalorder 1, %s17
      %p179 = scmp.lt.s32.totalorder %s17, 4
      %p180 = pnand %p178, %p179
      %p181 = pneg %p180
      // Predicated region
      $region29: #{tpu_custom_call.1} parent=5 // pred_check
        _
      $region30: #{tpu_custom_call.1} parent=5 // pred_check_branch
        %183 = sbr.rel (%p180) target = $region32
      $region31: #{tpu_custom_call.1} parent=5 // pred_region
        %s184 = ssub.s32 %s17, 1
        // Predicated region
        $region33: #{tpu_custom_call.1} parent=31 // pred_check
          %p185 = pneg %p38
        $region34: #{tpu_custom_call.1} parent=31 // pred_check_branch
          %187 = sbr.rel (%p185) target = $region36
        $region35: #{tpu_custom_call.1} parent=31 // pred_region
          %188 = dma.done [#allocation5], 64
        $region36: #{tpu_custom_call.1} parent=31 // pred_fallthru
          _
        // Predicated region
        $region37: #{tpu_custom_call.1} parent=31 // pred_check
          %p189 = pneg %p59
        $region38: #{tpu_custom_call.1} parent=31 // pred_check_branch
          %191 = sbr.rel (%p189) target = $region40
        $region39: #{tpu_custom_call.1} parent=31 // pred_region
          %192 = dma.done [#allocation6], 16
        $region40: #{tpu_custom_call.1} parent=31 // pred_fallthru
          _
        %s193 = sand.u32 %s72, 1
        %s194 = scalar_lea.sflag [#allocation3], %s193
        %s195 = sand.u32 %s72, 1
        %s196 = smul.addr %s195, 48
        %s197 = scalar_lea.vmem [#allocation8], %s196
        // Predicated region
        $region41: #{tpu_custom_call.1} parent=31 // pred_check
          %p198 = pneg %p85
        $region42: #{tpu_custom_call.1} parent=31 // pred_check_branch
          %200 = sbr.rel (%p198) target = $region44
        $region43: #{tpu_custom_call.1} parent=31 // pred_region
          %201 = dma.done %s194, 768
        $region44: #{tpu_custom_call.1} parent=31 // pred_fallthru
          _
        %202 = sfence
        %p203 = pneg %p38
        %p204 = pneg %p35
        %p205 = pneg %p59
        %p206 = pneg %p56
        %s207 = sand.u32 %s72, 1
        %s208 = scalar_lea.sflag [#allocation3], %s207
        %s209 = sand.u32 %s72, 1
        %s210 = smul.addr %s209, 48
        %s211 = scalar_lea.vmem [#allocation8], %s210
        %p212 = pneg %p85
        %p213 = pneg %p82
        %p214 = pneg %p111
        %p215 = pneg %p108
        %s216 = sand.u32 %s98, 1
        %s217 = scalar_lea.sflag [#allocation4], %s216
        %s218 = sand.u32 %s98, 1
        %s219 = smul.addr %s218, 48
        %s220 = scalar_lea.vmem [#allocation9], %s219
        %s221 = smul.u32 2, %s22
        %s222 = ssub.s32 5, %s221
        %p223 = scmp.lt.s32.totalorder %s222, 2
        %s224 = scalar_select %p223, %s222, 2
        %s225 = smul.u32 384, %s224
        %s226 = smul.u32 2, %s22
        %s227 = ssub.s32 5, %s226
        %p228 = scmp.lt.s32.totalorder %s227, 2
        %s229 = scalar_select %p228, %s227, 2
        %s230 = smul.u32 384, %s229
        %v231 = vld [vmem:[%s197] sm:$0xff]
        %v232 = vld [vmem:[%s197 + $0x8] sm:$0xff]
        %v233 = vld [vmem:[%s197 + $0x10] sm:$0xff]
        %v234 = vld [vmem:[%s197 + $0x18] sm:$0xff]
        %v235 = vld [vmem:[%s197 + $0x20] sm:$0xff]
        %v236 = vld [vmem:[%s197 + $0x28] sm:$0xff]
        %s237 = sld [smem:[#allocation2]]
        %v238 = vstv %s237
        %v239 = vmul.f32 %v231, %v238
        %v240 = vmul.f32 %v232, %v238
        %s241 = sld [smem:[#allocation2 + $0x1]]
        %v242 = vstv %s241
        %v243 = vmul.f32 %v233, %v242
        %v244 = vmul.f32 %v234, %v242
        %v245 = vadd.f32 %v239, %v243
        %v246 = vadd.f32 %v240, %v244
        %s247 = sld [smem:[#allocation2 + $0x2]]
        %v248 = vstv %s247
        %v249 = vmul.f32 %v235, %v248
        %v250 = vmul.f32 %v236, %v248
        %v251 = vadd.f32 %v245, %v249
        %v252 = vadd.f32 %v246, %v250
        %s253 = sld [smem:[#allocation7]]
        %v254 = vstv %s253
        %v255 = vadd.f32 %v251, %v254
        %v256 = vadd.f32 %v252, %v254
        %s257 = sld [smem:[#allocation2 + $0x80]]
        %v258 = vstv %s257
        %v259 = vmul.f32 %v231, %v258
        %v260 = vmul.f32 %v232, %v258
        %s261 = sld [smem:[#allocation2 + $0x81]]
        %v262 = vstv %s261
        %v263 = vmul.f32 %v233, %v262
        %v264 = vmul.f32 %v234, %v262
        %v265 = vadd.f32 %v259, %v263
        %v266 = vadd.f32 %v260, %v264
        %s267 = sld [smem:[#allocation2 + $0x82]]
        %v268 = vstv %s267
        %v269 = vmul.f32 %v235, %v268
        %v270 = vmul.f32 %v236, %v268
        %v271 = vadd.f32 %v265, %v269
        %v272 = vadd.f32 %v266, %v270
        %s273 = sld [smem:[#allocation7 + $0x1]]
        %v274 = vstv %s273
        %v275 = vadd.f32 %v271, %v274
        %v276 = vadd.f32 %v272, %v274
        %s277 = sld [smem:[#allocation2 + $0x100]]
        %v278 = vstv %s277
        %v279 = vmul.f32 %v231, %v278
        %v280 = vmul.f32 %v232, %v278
        %s281 = sld [smem:[#allocation2 + $0x101]]
        %v282 = vstv %s281
        %v283 = vmul.f32 %v233, %v282
        %v284 = vmul.f32 %v234, %v282
        %v285 = vadd.f32 %v279, %v283
        %v286 = vadd.f32 %v280, %v284
        %s287 = sld [smem:[#allocation2 + $0x102]]
        %v288 = vstv %s287
        %v289 = vmul.f32 %v235, %v288
        %v290 = vmul.f32 %v236, %v288
        %v291 = vadd.f32 %v285, %v289
        %v292 = vadd.f32 %v286, %v290
        %s293 = sld [smem:[#allocation7 + $0x2]]
        %v294 = vstv %s293
        %v295 = vadd.f32 %v291, %v294
        %v296 = vadd.f32 %v292, %v294
        %297 = vst [vmem:[%s220] sm:$0xff] %v255
        %298 = vst [vmem:[%s220 + $0x8] sm:$0xff] %v256
        %299 = vst [vmem:[%s220 + $0x10] sm:$0xff] %v275
        %300 = vst [vmem:[%s220 + $0x18] sm:$0xff] %v276
        %301 = vst [vmem:[%s220 + $0x20] sm:$0xff] %v295
        %302 = vst [vmem:[%s220 + $0x28] sm:$0xff] %v296
        %s303 = sand.u32 %s98, 1
        %s304 = scalar_lea.sflag [#allocation4], %s303
        %s305 = sand.u32 %s98, 1
        %s306 = smul.addr %s305, 48
        %s307 = scalar_lea.vmem [#allocation9], %s306
        // Predicated region
        $region45: #{tpu_custom_call.1} parent=31 // pred_check
          %p308 = pneg %p108
        $region46: #{tpu_custom_call.1} parent=31 // pred_check_branch
          %310 = sbr.rel (%p308) target = $region48
        $region47: #{tpu_custom_call.1} parent=31 // pred_region
          %s311 = smul.u32 2, %s22
          %s312 = ssub.s32 5, %s311
          %p313 = scmp.lt.s32.totalorder %s312, 2
          %s314 = scalar_select %p313, %s312, 2
          %s315 = smul.u32 384, %s314
          %s317 = ssub.s32 768, %s315
          %318 = vsyncadd %s304, %s317
          %p319 = scmp.ne.s32.totalorder 0, %s315
          %s320 = smul.addr %s311, 128
          %s321 = scalar_lea.hbm %s3, %s320
          %s322 = smul.u32 %s314, 8
          %s323 = smul.u32 %s322, 3
          %s324 = sshll.u32 %s307, 4
          %s325 = int_to_ptr.vmem [resolvable:$true] %s324
          %s326 = sshll.u32 %s323, 4
          %330 = dma.vmem_to_hbm [thread:$0]  (%p319), %s325, %s326, %s321, %s304, 256, 640, %s322
        $region48: #{tpu_custom_call.1} parent=31 // pred_fallthru
          _
      $region32: #{tpu_custom_call.1} parent=5 // pred_fallthru
        _
      %p331 = scmp.le.s32.totalorder 2, %s17
      // Predicated region
      $region49: #{tpu_custom_call.1} parent=5 // pred_check
        %p332 = pneg %p331
      $region50: #{tpu_custom_call.1} parent=5 // pred_check_branch
        %334 = sbr.rel (%p332) target = $region52
      $region51: #{tpu_custom_call.1} parent=5 // pred_region
        %s335 = ssub.s32 %s17, 2
        // Predicated region
        $region53: #{tpu_custom_call.1} parent=51 // pred_check
          %p336 = pneg %p114
        $region54: #{tpu_custom_call.1} parent=51 // pred_check_branch
          %338 = sbr.rel (%p336) target = $region56
        $region55: #{tpu_custom_call.1} parent=51 // pred_region
          %s339 = sand.u32 %s99, 1
          %s340 = scalar_lea.sflag [#allocation4], %s339
          %s341 = sand.u32 %s99, 1
          %s342 = smul.addr %s341, 48
          %s343 = scalar_lea.vmem [#allocation9], %s342
          %344 = dma.done %s340, 768
        $region56: #{tpu_custom_call.1} parent=51 // pred_fallthru
          _
      $region52: #{tpu_custom_call.1} parent=5 // pred_fallthru
        _
    $region6: #{tpu_custom_call.1} parent=1 // loop_footer
      %s21 = sadd.s32 1, %s17
    $region7: #{tpu_custom_call.1} parent=1 // loop_footer_branch
      %16 = sbr.rel target = $region3
    $region8: #{tpu_custom_call.1} parent=1 // loop_exit
      _
    %345 = vsyncpa [#allocation3], 1
    %s346 = scalar_lea.sflag [#allocation3], 1
    %347 = vsyncpa %s346, 1
    %348 = vsyncpa [#allocation4], 1
    %s349 = scalar_lea.sflag [#allocation4], 1
    %350 = vsyncpa %s349, 1
    %351 = vsyncpa [#allocation5], 1
    %s352 = scalar_lea.sflag [#allocation5], 1
    %353 = vsyncpa %s352, 1
    %354 = vsyncpa [#allocation6], 1
    %s355 = scalar_lea.sflag [#allocation6], 1
    %356 = vsyncpa %s355, 1

</llo_original>
